<compile_context>
chip_gen: v6e
topology: v6e:2x2x1
jax: 0.10.0
libtpu: 0.0.40
codegen_flags: <defaults>
</compile_context>

<pallas_src>
import jax
import jax.numpy as jnp
from jax import lax
from jax.experimental import pallas as pl
from jax.experimental.pallas import tpu as pltpu


def _round_up(a, b):
    return (a + b - 1) // b * b


def _l2normalize(v, eps=1e-12):
    return v / jnp.maximum(jnp.sqrt(jnp.sum(v * v)), eps)


# ----------------------------------------------------------------------------
# Pallas kernel: per (batch n, Cout tile) compute the dense (stride-1) conv as
# KH*KW shifted flat-window matmuls with f32 accumulation, then add bias.
# ----------------------------------------------------------------------------
def _make_conv_kernel(offsets, T1):
    def kernel(w_ref, x_ref, b_ref, o_ref):
        # w_ref: (KH*KW, TCout, Cin)   bf16
        # x_ref: (Cin, L)              bf16   (zero-padded input, rows flattened)
        # b_ref: (TCout, 1)            f32
        # o_ref: (TCout, T1)           out dtype
        acc = jnp.dot(w_ref[0], x_ref[:, pl.ds(offsets[0], T1)],
                      preferred_element_type=jnp.float32)
        for kk in range(1, len(offsets)):
            acc = acc + jnp.dot(w_ref[kk], x_ref[:, pl.ds(offsets[kk], T1)],
                                preferred_element_type=jnp.float32)
        o_ref[...] = (acc + b_ref[...]).astype(o_ref.dtype)
    return kernel


def spectral_conv2d(x, weight, bias, u, *, stride=1, padding=0, dilation=1,
                    groups=1, n_power_iterations=1,
                    compute_dtype=jnp.bfloat16):
    """Forward pass of spectral_norm(Conv2d) (training mode).

    Returns (out_nchw, new_u); new_u is the updated power-iteration buffer.
    """
    assert groups == 1, "groups > 1 not implemented"  # TODO(synk)
    N, Cin, H, W = x.shape
    Cout, Cin_w, KH, KW = weight.shape
    assert Cin_w == Cin

    # ---- spectral norm: power iteration + sigma (plain JAX, parameter-sized) ----
    w_mat = weight.reshape(Cout, -1).astype(jnp.float32)
    u_new = u.astype(jnp.float32)
    v_new = None
    for _ in range(n_power_iterations):
        v_new = _l2normalize(w_mat.T @ u_new)
        u_new = _l2normalize(w_mat @ v_new)
    sigma = jnp.dot(u_new, w_mat @ v_new)
    w_sn = weight.astype(jnp.float32) / sigma

    # ---- geometry (kernel computes the dense, stride-1 output) ----
    H_pad = H + 2 * padding
    Wr = W + 2 * padding                       # padded row length = flat row stride
    H1 = H_pad - dilation * (KH - 1)           # dense output height
    W1 = Wr - dilation * (KW - 1)              # dense output width (valid columns)
    assert H1 >= 1 and W1 >= 1, "kernel larger than padded input"
    T1 = H1 * Wr                               # flat (lane-dense) output extent

    # ---- zero-pad + flatten input once, in bf16 (no materialized im2col) ----
    # One extra zero row at the bottom keeps the last shifted flat window in bounds.
    extra = 1 if KW > 1 else 0
    xp = jnp.pad(x.astype(compute_dtype),
                 ((0, 0), (0, 0), (padding, padding + extra), (padding, padding)))
    L = (H_pad + extra) * Wr
    x_flat = xp.reshape(N, Cin, L)

    # flat-window offsets for each (kh, kw) tap
    offsets = tuple(kh * dilation * Wr + kw * dilation
                    for kh in range(KH) for kw in range(KW))

    out_dtype = x.dtype
    cb = jnp.dtype(compute_dtype).itemsize
    ob = jnp.dtype(out_dtype).itemsize

    # ---- per-generation VMEM budget (~48 MiB on v7x, ~96 MiB on v5e/v6e) ----
    try:
        cap = int(getattr(pltpu.get_tpu_info(), "vmem_capacity_bytes", 64 << 20))
    except Exception:
        cap = 64 << 20
    vmem_limit = int(cap * 0.75)
    ws_budget = int(vmem_limit * 0.8)          # headroom for compiler temporaries

    Cout8 = _round_up(Cout, 8)

    def working_set(tco):
        return (2 * Cin * L * cb                    # x tile (double-buffered)
                + 2 * KH * KW * tco * Cin * cb      # weight tile (double-buffered)
                + 2 * tco * T1 * ob                 # output tile (double-buffered)
                + tco * T1 * 4                      # f32 accumulator
                + 2 * tco * 4)                      # bias

    TCout = min(Cout8, 512)
    while TCout > 8 and working_set(TCout) > ws_budget:
        TCout -= 8
    # TODO(synk): if even TCout=8 exceeds the budget the activation needs halo tiling.
    # Keep >= 2 grid steps so both TensorCores get work on 2-TC parts (v7x).
    if N == 1 and TCout >= Cout8 and Cout8 >= 16:
        TCout = _round_up(Cout8 // 2, 8)
    Cout_pad = _round_up(Cout, TCout)
    n_co = Cout_pad // TCout

    # weight laid out (KH*KW, Cout_pad, Cin) to match the flat-window offsets
    w_gemm = jnp.transpose(w_sn, (2, 3, 0, 1)).reshape(KH * KW, Cout, Cin)
    if Cout_pad != Cout:
        w_gemm = jnp.pad(w_gemm, ((0, 0), (0, Cout_pad - Cout), (0, 0)))
    w_gemm = w_gemm.astype(compute_dtype)

    if bias is None:
        b2 = jnp.zeros((Cout_pad, 1), jnp.float32)
    else:
        b2 = jnp.pad(bias.astype(jnp.float32),
                     (0, Cout_pad - Cout)).reshape(Cout_pad, 1)

    kernel = _make_conv_kernel(offsets, T1)

    out1 = pl.pallas_call(
        kernel,
        out_shape=jax.ShapeDtypeStruct((N, Cout_pad, T1), out_dtype),
        grid_spec=pltpu.PrefetchScalarGridSpec(
            num_scalar_prefetch=0,
            grid=(N, n_co),                      # co innermost -> x tile reused across co
            in_specs=[
                pl.BlockSpec((KH * KW, TCout, Cin), lambda n, co: (0, co, 0)),  # weights
                pl.BlockSpec((None, Cin, L), lambda n, co: (n, 0, 0)),          # x (per n)
                pl.BlockSpec((TCout, 1), lambda n, co: (co, 0)),                # bias
            ],
            out_specs=pl.BlockSpec((None, TCout, T1), lambda n, co: (n, co, 0)),
        ),
        compiler_params=pltpu.CompilerParams(
            dimension_semantics=("parallel", "parallel"),
            vmem_limit_bytes=vmem_limit),
    )(w_gemm, x_flat, b2)

    # drop Cout padding, un-flatten, trim the wrap columns, then apply stride.
    out = out1[:, :Cout, :].reshape(N, Cout, H1, Wr)[:, :, :, :W1]
    if stride > 1:
        out = out[:, :, ::stride, ::stride]
    return out, u_new


if __name__ == "__main__":
    key = jax.random.PRNGKey(0)
    N, Cin, Cout, H, W = 2, 4, 8, 16, 16
    KH = KW = 3
    stride, padding, dilation = 1, 1, 1

    k1, k2, k3, k4 = jax.random.split(key, 4)
    x = jax.random.normal(k1, (N, Cin, H, W), dtype=jnp.float32)
    weight = 0.1 * jax.random.normal(k2, (Cout, Cin, KH, KW), dtype=jnp.float32)
    bias = 0.1 * jax.random.normal(k3, (Cout,), dtype=jnp.float32)
    u0 = _l2normalize(jax.random.normal(k4, (Cout,), dtype=jnp.float32))

    out, u_new = spectral_conv2d(x, weight, bias, u0,
                                 stride=stride, padding=padding,
                                 dilation=dilation)
    out = jax.block_until_ready(out)

    # ---- reference: same spectral-normalized weight; operands rounded to the
    # kernel's bf16 compute dtype so the comparison isolates kernel correctness
    # (accumulation is f32 in both paths). ----
    w_mat = weight.reshape(Cout, -1)
    v = _l2normalize(w_mat.T @ u0)
    u1 = _l2normalize(w_mat @ v)
    sigma = jnp.dot(u1, w_mat @ v)
    w_sn = weight / sigma
    w_bf = w_sn.astype(jnp.bfloat16).astype(jnp.float32)
    x_bf = x.astype(jnp.bfloat16).astype(jnp.float32)
    ref = lax.conv_general_dilated(
        x_bf, w_bf,
        window_strides=(stride, stride),
        padding=((padding, padding), (padding, padding)),
        rhs_dilation=(dilation, dilation),
        dimension_numbers=("NCHW", "OIHW", "NCHW"),
        precision=lax.Precision.HIGHEST) + bias[None, :, None, None]

    assert out.shape == ref.shape and out.dtype == x.dtype
    assert jnp.allclose(out, ref, atol=5e-3, rtol=5e-3), "mismatch vs reference"
    assert u_new.shape == u0.shape

    print("KERNEL_OK")
</pallas_src>

<mosaic_0001>
module attributes {stable_mosaic.version = 11 : i64} {
  func.func @kernel(%arg0: i32, %arg1: i32, %arg2: memref<9x8x4xbf16, #tpu.memory_space<vmem>>, %arg3: memref<1x4x342xbf16, #tpu.memory_space<vmem>>, %arg4: memref<8x1xf32, #tpu.memory_space<vmem>>, %arg5: memref<1x8x288xf32, #tpu.memory_space<vmem>>) attributes {dimension_semantics = [#tpu.dimension_semantics<parallel>, #tpu.dimension_semantics<parallel>], iteration_bounds = array<i64: 2, 1>, scalar_prefetch = 0 : i64, scratch_operands = 0 : i64, tpu.core_type = #tpu.core_type<tc>, window_params = [{transform_indices = @transform_0, window_bounds = array<i64: 9, 8, 4>}, {transform_indices = @transform_1, window_bounds = array<i64: 1, 4, 342>}, {transform_indices = @transform_2, window_bounds = array<i64: 8, 1>}, {transform_indices = @transform_3, window_bounds = array<i64: 1, 8, 288>}]} {
    %c0 = arith.constant 0 : index
    %c0_0 = arith.constant 0 : index
    %c0_1 = arith.constant 0 : index
    %0 = vector.load %arg2[%c0, %c0_0, %c0_1] : memref<9x8x4xbf16, #tpu.memory_space<vmem>>, vector<1x8x4xbf16>
    %1 = vector.shape_cast %0 : vector<1x8x4xbf16> to vector<8x4xbf16>
    %c0_2 = arith.constant 0 : index
    %c0_3 = arith.constant 0 : index
    %c0_4 = arith.constant 0 : index
    %2 = vector.load %arg3[%c0_2, %c0_3, %c0_4] : memref<1x4x342xbf16, #tpu.memory_space<vmem>>, vector<1x4x288xbf16>
    %3 = vector.shape_cast %2 : vector<1x4x288xbf16> to vector<4x288xbf16>
    %cst = arith.constant dense<0.000000e+00> : vector<8x288xf32>
    %4 = tpu.matmul %1, %3, %cst {dimension_numbers = #tpu.dot_dimension_numbers<[1], [0], [0], [1], [0, 0, 1, 1], [], []>} : vector<8x4xbf16>, vector<4x288xbf16>, vector<8x288xf32> -> vector<8x288xf32>
    %c1 = arith.constant 1 : index
    %c0_5 = arith.constant 0 : index
    %c0_6 = arith.constant 0 : index
    %5 = vector.load %arg2[%c1, %c0_5, %c0_6] : memref<9x8x4xbf16, #tpu.memory_space<vmem>>, vector<1x8x4xbf16>
    %6 = vector.shape_cast %5 : vector<1x8x4xbf16> to vector<8x4xbf16>
    %c0_7 = arith.constant 0 : index
    %c0_8 = arith.constant 0 : index
    %c1_9 = arith.constant 1 : index
    %7 = vector.load %arg3[%c0_7, %c0_8, %c1_9] : memref<1x4x342xbf16, #tpu.memory_space<vmem>>, vector<1x4x288xbf16>
    %8 = vector.shape_cast %7 : vector<1x4x288xbf16> to vector<4x288xbf16>
    %cst_10 = arith.constant dense<0.000000e+00> : vector<8x288xf32>
    %9 = tpu.matmul %6, %8, %cst_10 {dimension_numbers = #tpu.dot_dimension_numbers<[1], [0], [0], [1], [0, 0, 1, 1], [], []>} : vector<8x4xbf16>, vector<4x288xbf16>, vector<8x288xf32> -> vector<8x288xf32>
    %10 = arith.addf %4, %9 : vector<8x288xf32>
    %c2 = arith.constant 2 : index
    %c0_11 = arith.constant 0 : index
    %c0_12 = arith.constant 0 : index
    %11 = vector.load %arg2[%c2, %c0_11, %c0_12] : memref<9x8x4xbf16, #tpu.memory_space<vmem>>, vector<1x8x4xbf16>
    %12 = vector.shape_cast %11 : vector<1x8x4xbf16> to vector<8x4xbf16>
    %c0_13 = arith.constant 0 : index
    %c0_14 = arith.constant 0 : index
    %c2_15 = arith.constant 2 : index
    %13 = vector.load %arg3[%c0_13, %c0_14, %c2_15] : memref<1x4x342xbf16, #tpu.memory_space<vmem>>, vector<1x4x288xbf16>
    %14 = vector.shape_cast %13 : vector<1x4x288xbf16> to vector<4x288xbf16>
    %cst_16 = arith.constant dense<0.000000e+00> : vector<8x288xf32>
    %15 = tpu.matmul %12, %14, %cst_16 {dimension_numbers = #tpu.dot_dimension_numbers<[1], [0], [0], [1], [0, 0, 1, 1], [], []>} : vector<8x4xbf16>, vector<4x288xbf16>, vector<8x288xf32> -> vector<8x288xf32>
    %16 = arith.addf %10, %15 : vector<8x288xf32>
    %c3 = arith.constant 3 : index
    %c0_17 = arith.constant 0 : index
    %c0_18 = arith.constant 0 : index
    %17 = vector.load %arg2[%c3, %c0_17, %c0_18] : memref<9x8x4xbf16, #tpu.memory_space<vmem>>, vector<1x8x4xbf16>
    %18 = vector.shape_cast %17 : vector<1x8x4xbf16> to vector<8x4xbf16>
    %c0_19 = arith.constant 0 : index
    %c0_20 = arith.constant 0 : index
    %c18 = arith.constant 18 : index
    %19 = vector.load %arg3[%c0_19, %c0_20, %c18] : memref<1x4x342xbf16, #tpu.memory_space<vmem>>, vector<1x4x288xbf16>
    %20 = vector.shape_cast %19 : vector<1x4x288xbf16> to vector<4x288xbf16>
    %cst_21 = arith.constant dense<0.000000e+00> : vector<8x288xf32>
    %21 = tpu.matmul %18, %20, %cst_21 {dimension_numbers = #tpu.dot_dimension_numbers<[1], [0], [0], [1], [0, 0, 1, 1], [], []>} : vector<8x4xbf16>, vector<4x288xbf16>, vector<8x288xf32> -> vector<8x288xf32>
    %22 = arith.addf %16, %21 : vector<8x288xf32>
    %c4 = arith.constant 4 : index
    %c0_22 = arith.constant 0 : index
    %c0_23 = arith.constant 0 : index
    %23 = vector.load %arg2[%c4, %c0_22, %c0_23] : memref<9x8x4xbf16, #tpu.memory_space<vmem>>, vector<1x8x4xbf16>
    %24 = vector.shape_cast %23 : vector<1x8x4xbf16> to vector<8x4xbf16>
    %c0_24 = arith.constant 0 : index
    %c0_25 = arith.constant 0 : index
    %c19 = arith.constant 19 : index
    %25 = vector.load %arg3[%c0_24, %c0_25, %c19] : memref<1x4x342xbf16, #tpu.memory_space<vmem>>, vector<1x4x288xbf16>
    %26 = vector.shape_cast %25 : vector<1x4x288xbf16> to vector<4x288xbf16>
    %cst_26 = arith.constant dense<0.000000e+00> : vector<8x288xf32>
    %27 = tpu.matmul %24, %26, %cst_26 {dimension_numbers = #tpu.dot_dimension_numbers<[1], [0], [0], [1], [0, 0, 1, 1], [], []>} : vector<8x4xbf16>, vector<4x288xbf16>, vector<8x288xf32> -> vector<8x288xf32>
    %28 = arith.addf %22, %27 : vector<8x288xf32>
    %c5 = arith.constant 5 : index
    %c0_27 = arith.constant 0 : index
    %c0_28 = arith.constant 0 : index
    %29 = vector.load %arg2[%c5, %c0_27, %c0_28] : memref<9x8x4xbf16, #tpu.memory_space<vmem>>, vector<1x8x4xbf16>
    %30 = vector.shape_cast %29 : vector<1x8x4xbf16> to vector<8x4xbf16>
    %c0_29 = arith.constant 0 : index
    %c0_30 = arith.constant 0 : index
    %c20 = arith.constant 20 : index
    %31 = vector.load %arg3[%c0_29, %c0_30, %c20] : memref<1x4x342xbf16, #tpu.memory_space<vmem>>, vector<1x4x288xbf16>
    %32 = vector.shape_cast %31 : vector<1x4x288xbf16> to vector<4x288xbf16>
    %cst_31 = arith.constant dense<0.000000e+00> : vector<8x288xf32>
    %33 = tpu.matmul %30, %32, %cst_31 {dimension_numbers = #tpu.dot_dimension_numbers<[1], [0], [0], [1], [0, 0, 1, 1], [], []>} : vector<8x4xbf16>, vector<4x288xbf16>, vector<8x288xf32> -> vector<8x288xf32>
    %34 = arith.addf %28, %33 : vector<8x288xf32>
    %c6 = arith.constant 6 : index
    %c0_32 = arith.constant 0 : index
    %c0_33 = arith.constant 0 : index
    %35 = vector.load %arg2[%c6, %c0_32, %c0_33] : memref<9x8x4xbf16, #tpu.memory_space<vmem>>, vector<1x8x4xbf16>
    %36 = vector.shape_cast %35 : vector<1x8x4xbf16> to vector<8x4xbf16>
    %c0_34 = arith.constant 0 : index
    %c0_35 = arith.constant 0 : index
    %c36 = arith.constant 36 : index
    %37 = vector.load %arg3[%c0_34, %c0_35, %c36] : memref<1x4x342xbf16, #tpu.memory_space<vmem>>, vector<1x4x288xbf16>
    %38 = vector.shape_cast %37 : vector<1x4x288xbf16> to vector<4x288xbf16>
    %cst_36 = arith.constant dense<0.000000e+00> : vector<8x288xf32>
    %39 = tpu.matmul %36, %38, %cst_36 {dimension_numbers = #tpu.dot_dimension_numbers<[1], [0], [0], [1], [0, 0, 1, 1], [], []>} : vector<8x4xbf16>, vector<4x288xbf16>, vector<8x288xf32> -> vector<8x288xf32>
    %40 = arith.addf %34, %39 : vector<8x288xf32>
    %c7 = arith.constant 7 : index
    %c0_37 = arith.constant 0 : index
    %c0_38 = arith.constant 0 : index
    %41 = vector.load %arg2[%c7, %c0_37, %c0_38] : memref<9x8x4xbf16, #tpu.memory_space<vmem>>, vector<1x8x4xbf16>
    %42 = vector.shape_cast %41 : vector<1x8x4xbf16> to vector<8x4xbf16>
    %c0_39 = arith.constant 0 : index
    %c0_40 = arith.constant 0 : index
    %c37 = arith.constant 37 : index
    %43 = vector.load %arg3[%c0_39, %c0_40, %c37] : memref<1x4x342xbf16, #tpu.memory_space<vmem>>, vector<1x4x288xbf16>
    %44 = vector.shape_cast %43 : vector<1x4x288xbf16> to vector<4x288xbf16>
    %cst_41 = arith.constant dense<0.000000e+00> : vector<8x288xf32>
    %45 = tpu.matmul %42, %44, %cst_41 {dimension_numbers = #tpu.dot_dimension_numbers<[1], [0], [0], [1], [0, 0, 1, 1], [], []>} : vector<8x4xbf16>, vector<4x288xbf16>, vector<8x288xf32> -> vector<8x288xf32>
    %46 = arith.addf %40, %45 : vector<8x288xf32>
    %c8 = arith.constant 8 : index
    %c0_42 = arith.constant 0 : index
    %c0_43 = arith.constant 0 : index
    %47 = vector.load %arg2[%c8, %c0_42, %c0_43] : memref<9x8x4xbf16, #tpu.memory_space<vmem>>, vector<1x8x4xbf16>
    %48 = vector.shape_cast %47 : vector<1x8x4xbf16> to vector<8x4xbf16>
    %c0_44 = arith.constant 0 : index
    %c0_45 = arith.constant 0 : index
    %c38 = arith.constant 38 : index
    %49 = vector.load %arg3[%c0_44, %c0_45, %c38] : memref<1x4x342xbf16, #tpu.memory_space<vmem>>, vector<1x4x288xbf16>
    %50 = vector.shape_cast %49 : vector<1x4x288xbf16> to vector<4x288xbf16>
    %cst_46 = arith.constant dense<0.000000e+00> : vector<8x288xf32>
    %51 = tpu.matmul %48, %50, %cst_46 {dimension_numbers = #tpu.dot_dimension_numbers<[1], [0], [0], [1], [0, 0, 1, 1], [], []>} : vector<8x4xbf16>, vector<4x288xbf16>, vector<8x288xf32> -> vector<8x288xf32>
    %52 = arith.addf %46, %51 : vector<8x288xf32>
    %c0_47 = arith.constant 0 : index
    %c0_48 = arith.constant 0 : index
    %53 = vector.load %arg4[%c0_47, %c0_48] : memref<8x1xf32, #tpu.memory_space<vmem>>, vector<8x1xf32>
    %54 = vector.broadcast %53 : vector<8x1xf32> to vector<8x288xf32>
    %55 = arith.addf %52, %54 : vector<8x288xf32>
    %c0_49 = arith.constant 0 : index
    %c0_50 = arith.constant 0 : index
    %c0_51 = arith.constant 0 : index
    %56 = vector.load %arg5[%c0_49, %c0_50, %c0_51] : memref<1x8x288xf32, #tpu.memory_space<vmem>>, vector<1x8x288xf32>
    %57 = vector.shape_cast %56 : vector<1x8x288xf32> to vector<8x288xf32>
    %58 = vector.shape_cast %55 : vector<8x288xf32> to vector<1x8x288xf32>
    tpu.vector_store %arg5[%c0_49, %c0_50, %c0_51], %58 {strides = array<i32>} : memref<1x8x288xf32, #tpu.memory_space<vmem>>, vector<1x8x288xf32>,
    return
  }
  func.func @transform_0(%arg0: i32, %arg1: i32) -> (i32, i32, i32) {
    %c0_i32 = arith.constant 0 : i32
    %c0_i32_0 = arith.constant 0 : i32
    %c0_i32_1 = arith.constant 0 : i32
    return %c0_i32, %arg1, %c0_i32_0 : i32, i32, i32
  }
  func.func @transform_1(%arg0: i32, %arg1: i32) -> (i32, i32, i32) {
    %c0_i32 = arith.constant 0 : i32
    %c0_i32_0 = arith.constant 0 : i32
    %c0_i32_1 = arith.constant 0 : i32
    return %arg0, %c0_i32, %c0_i32_0 : i32, i32, i32
  }
  func.func @transform_2(%arg0: i32, %arg1: i32) -> (i32, i32) {
    %c0_i32 = arith.constant 0 : i32
    %c0_i32_0 = arith.constant 0 : i32
    return %arg1, %c0_i32 : i32, i32
  }
  func.func @transform_3(%arg0: i32, %arg1: i32) -> (i32, i32, i32) {
    %c0_i32 = arith.constant 0 : i32
    %c0_i32_0 = arith.constant 0 : i32
    return %arg0, %arg1, %c0_i32 : i32, i32, i32
  }
}

</mosaic_0001>

<llo_original>
// kernel: tpu_custom_call.1
$region0: #{tpu_custom_call.1}
  #allocation0 [shape = 'u32[]', space=smem, size = 0x4, offset = 0x4, fixed_abs, tag = 'smem constant byte address 0x4 - core index']
  #allocation1 [shape = 'u32[144,128]{1,0:T(1,128)}', space=vmem, size = 0x12000, scoped, tag = 'internal scratch']
  %s0 = inlined_call_operand.vmem [shape: bf16[9,8,4], index: 0, kind: input, shape index: {}]
  %s1 = inlined_call_operand.vmem [shape: bf16[2,4,342], index: 1, kind: input, shape index: {}]
  %s2 = inlined_call_operand.vmem [shape: f32[8,1], index: 2, kind: input, shape index: {}]
  %s3 = inlined_call_operand.hbm [shape: f32[2,8,288], index: 3, kind: output, shape index: {}]
  %s4 = sld [smem:[#allocation0]]
  $region45: #{tpu_custom_call.1} parent=0
    _
  %s6 = ssub.s32 1, %s4
  %s7 = scalar_select 0, %s6, %s4
  $region1: #{tpu_custom_call.1} parent=0
    #allocation2 [shape = 'u8[24576]{0}', space=vmem, size = 0x6000, scoped, tag = 'output window, operand 0']
    #allocation3 [shape = 's32[2]{0}', space=sflag, size = 0x8, scoped, tag = 'scoped memory for tpu_custom_call.1']
    %8 = vsyncpa [#allocation3], 0
    %s9 = scalar_lea.sflag [#allocation3], 1
    %10 = vsyncpa %s9, 0
    loop: start=0, step=1, limit=4
    $region2: #{tpu_custom_call.1} parent=1 // loop_pre_header
      _
    $region3: #{tpu_custom_call.1} parent=1 // loop_header
      %s12 = sphi 0, %s16
      %p13 = scmp.ge.s32.totalorder %s12, 4
      %s19 = sphi 0, %s31
      %s20 = sphi 0, %s27
      %s21 = sphi 0, %s19
      %s22 = sphi 0, %s20
      %s23 = sphi 0, %s21
      %s24 = sphi 0, %s22
      %s34 = sphi 0, %s36
      %s37 = sphi 0, %s34
      %s38 = sphi 0, %s37
      %s54 = sphi 0, %s38
      %s60 = sphi 0, %s62
      %s63 = sphi 0, %s60
      %s64 = sphi 0, %s63
      %s80 = sphi 0, %s64
      %s86 = sphi 0, %s88
      %s89 = sphi 0, %s86
      %s90 = sphi 0, %s89
      %s106 = sphi 0, %s90
      %s114 = sphi 0, %s116
      %s117 = sphi 0, %s114
      %s118 = sphi 0, %s117
      %s134 = sphi 0, %s118
    $region4: #{tpu_custom_call.1} parent=1 // loop_header_branch
      %15 = sbr.rel (%p13) target = $region8
    $region5: #{tpu_custom_call.1} parent=1 // loop_body
      %s17 = ssub.s32 %s12, 1
      %s18 = ssub.s32 %s12, 2
      %s25 = sadd.s32 1, %s20
      %p26 = scmp.ge.s32.totalorder %s25, 1
      %s27 = scalar_select %p26, 0, %s25
      %s28 = sadd.s32 1, %s19
      %s29 = scalar_select %p26, %s28, %s19
      %p30 = scmp.ge.s32.totalorder %s29, 2
      %s31 = scalar_select %p30, 0, %s29
      %s32 = ssub.s32 %s20, %s27
      %p33 = scmp.eq.s32.totalorder %s32, 0
      %s35 = sadd.s32 %s34, 1
      %s36 = scalar_select %p33, %s34, %s35
      %p39 = pneg %p33
      %p40 = scmp.eq.s32.totalorder %s12, 1
      %p41 = por %p39, %p40
      %p42 = scmp.ne.s32.totalorder %s34, %s37
      %p43 = scmp.eq.s32.totalorder %s12, 0
      %p44 = por %p42, %p43
      %p45 = scmp.ne.s32.totalorder %s34, %s37
      %p46 = scmp.eq.s32.totalorder %s17, 1
      %p47 = por %p45, %p46
      %p48 = scmp.ne.s32.totalorder %s37, %s38
      %p49 = scmp.eq.s32.totalorder %s17, 0
      %p50 = por %p48, %p49
      %p51 = scmp.ne.s32.totalorder %s37, %s38
      %p52 = scmp.eq.s32.totalorder %s18, 1
      %p53 = por %p51, %p52
      %p55 = scmp.ne.s32.totalorder %s38, %s54
      %p56 = scmp.eq.s32.totalorder %s18, 0
      %p57 = por %p55, %p56
      %s58 = ssub.s32 %s19, %s31
      %p59 = scmp.eq.s32.totalorder %s58, 0
      %s61 = sadd.s32 %s60, 1
      %s62 = scalar_select %p59, %s60, %s61
      %p65 = pneg %p59
      %p66 = scmp.eq.s32.totalorder %s12, 1
      %p67 = por %p65, %p66
      %p68 = scmp.ne.s32.totalorder %s60, %s63
      %p69 = scmp.eq.s32.totalorder %s12, 0
      %p70 = por %p68, %p69
      %p71 = scmp.ne.s32.totalorder %s60, %s63
      %p72 = scmp.eq.s32.totalorder %s17, 1
      %p73 = por %p71, %p72
      %p74 = scmp.ne.s32.totalorder %s63, %s64
      %p75 = scmp.eq.s32.totalorder %s17, 0
      %p76 = por %p74, %p75
      %p77 = scmp.ne.s32.totalorder %s63, %s64
      %p78 = scmp.eq.s32.totalorder %s18, 1
      %p79 = por %p77, %p78
      %p81 = scmp.ne.s32.totalorder %s64, %s80
      %p82 = scmp.eq.s32.totalorder %s18, 0
      %p83 = por %p81, %p82
      %s84 = ssub.s32 %s20, %s27
      %p85 = scmp.eq.s32.totalorder %s84, 0
      %s87 = sadd.s32 %s86, 1
      %s88 = scalar_select %p85, %s86, %s87
      %p91 = pneg %p85
      %p92 = scmp.eq.s32.totalorder %s12, 1
      %p93 = por %p91, %p92
      %p94 = scmp.ne.s32.totalorder %s86, %s89
      %p95 = scmp.eq.s32.totalorder %s12, 0
      %p96 = por %p94, %p95
      %p97 = scmp.ne.s32.totalorder %s86, %s89
      %p98 = scmp.eq.s32.totalorder %s17, 1
      %p99 = por %p97, %p98
      %p100 = scmp.ne.s32.totalorder %s89, %s90
      %p101 = scmp.eq.s32.totalorder %s17, 0
      %p102 = por %p100, %p101
      %p103 = scmp.ne.s32.totalorder %s89, %s90
      %p104 = scmp.eq.s32.totalorder %s18, 1
      %p105 = por %p103, %p104
      %p107 = scmp.ne.s32.totalorder %s90, %s106
      %p108 = scmp.eq.s32.totalorder %s18, 0
      %p109 = por %p107, %p108
      %s110 = ssub.s32 %s19, %s31
      %s111 = ssub.s32 %s20, %s27
      %s112 = sor.u32 %s110, %s111
      %p113 = scmp.eq.s32.totalorder %s112, 0
      %s115 = sadd.s32 %s114, 1
      %s116 = scalar_select %p113, %s114, %s115
      %p119 = pneg %p113
      %p120 = scmp.eq.s32.totalorder %s12, 1
      %p121 = por %p119, %p120
      %p122 = scmp.ne.s32.totalorder %s114, %s117
      %p123 = scmp.eq.s32.totalorder %s12, 0
      %p124 = por %p122, %p123
      %p125 = scmp.ne.s32.totalorder %s114, %s117
      %p126 = scmp.eq.s32.totalorder %s17, 1
      %p127 = por %p125, %p126
      %p128 = scmp.ne.s32.totalorder %s117, %s118
      %p129 = scmp.eq.s32.totalorder %s17, 0
      %p130 = por %p128, %p129
      %p131 = scmp.ne.s32.totalorder %s117, %s118
      %p132 = scmp.eq.s32.totalorder %s18, 1
      %p133 = por %p131, %p132
      %p135 = scmp.ne.s32.totalorder %s118, %s134
      %p136 = scmp.eq.s32.totalorder %s18, 0
      %p137 = por %p135, %p136
      %p138 = scmp.le.s32.totalorder 1, %s12
      %p139 = scmp.lt.s32.totalorder %s12, 3
      %p140 = pnand %p138, %p139
      %p141 = pneg %p140
      // Predicated region
      $region9: #{tpu_custom_call.1} parent=5 // pred_check
        _
      $region10: #{tpu_custom_call.1} parent=5 // pred_check_branch
        %143 = sbr.rel (%p140) target = $region12
      $region11: #{tpu_custom_call.1} parent=5 // pred_region
        %s144 = ssub.s32 %s12, 1
        // Predicated region
        $region13: #{tpu_custom_call.1} parent=11 // pred_check
          %p145 = pneg %p50
        $region14: #{tpu_custom_call.1} parent=11 // pred_check_branch
          %147 = sbr.rel (%p145) target = $region16
        $region15: #{tpu_custom_call.1} parent=11 // pred_region
          %p148 = scmp.lt.s32.totalorder %s22, 0
          %s149 = scalar_select %p148, %s22, 0
          %s150 = smul.addr %s149, 4
          %s151 = scalar_lea.vmem %s0, %s150
        $region16: #{tpu_custom_call.1} parent=11 // pred_fallthru
          _
        // Predicated region
        $region17: #{tpu_custom_call.1} parent=11 // pred_check
          %p152 = pneg %p102
        $region18: #{tpu_custom_call.1} parent=11 // pred_check_branch
          %154 = sbr.rel (%p152) target = $region20
        $region19: #{tpu_custom_call.1} parent=11 // pred_region
          %p155 = scmp.lt.s32.totalorder %s22, 0
          %s156 = scalar_select %p155, %s22, 0
          %s157 = smul.addr %s156, 8
          %s158 = scalar_lea.vmem %s2, %s157
        $region20: #{tpu_custom_call.1} parent=11 // pred_fallthru
          _
      $region12: #{tpu_custom_call.1} parent=5 // pred_fallthru
        _
      %p159 = scmp.lt.s32.totalorder %s12, 2
      // Predicated region
      $region21: #{tpu_custom_call.1} parent=5 // pred_check
        %p160 = pneg %p159
      $region22: #{tpu_custom_call.1} parent=5 // pred_check_branch
        %162 = sbr.rel (%p160) target = $region24
      $region23: #{tpu_custom_call.1} parent=5 // pred_region
        // Predicated region
        $region25: #{tpu_custom_call.1} parent=23 // pred_check
          %p163 = pneg %p70
        $region26: #{tpu_custom_call.1} parent=23 // pred_check_branch
          %165 = sbr.rel (%p163) target = $region28
        $region27: #{tpu_custom_call.1} parent=23 // pred_region
          %p166 = scmp.lt.s32.totalorder %s19, 1
          %s167 = scalar_select %p166, %s19, 1
          %s168 = smul.addr %s167, 3
          %s169 = smul.addr %s168, 2
          %s170 = scalar_lea.vmem %s1, %s169
        $region28: #{tpu_custom_call.1} parent=23 // pred_fallthru
          _
      $region24: #{tpu_custom_call.1} parent=5 // pred_fallthru
        _
      %p171 = scmp.le.s32.totalorder 1, %s12
      %p172 = scmp.lt.s32.totalorder %s12, 3
      %p173 = pnand %p171, %p172
      %p174 = pneg %p173
      // Predicated region
      $region29: #{tpu_custom_call.1} parent=5 // pred_check
        _
      $region30: #{tpu_custom_call.1} parent=5 // pred_check_branch
        %176 = sbr.rel (%p173) target = $region32
      $region31: #{tpu_custom_call.1} parent=5 // pred_region
        %s177 = ssub.s32 %s12, 1
        %p178 = scmp.lt.s32.totalorder %s22, 0
        %s179 = scalar_select %p178, %s22, 0
        %s180 = smul.addr %s179, 4
        %s181 = scalar_lea.vmem %s0, %s180
        %p182 = pneg %p50
        %p183 = pneg %p47
        %p184 = scmp.lt.s32.totalorder %s21, 1
        %s185 = scalar_select %p184, %s21, 1
        %s186 = smul.addr %s185, 3
        %s187 = smul.addr %s186, 2
        %s188 = scalar_lea.vmem %s1, %s187
        %p189 = pneg %p76
        %p190 = pneg %p73
        %p191 = scmp.lt.s32.totalorder %s22, 0
        %s192 = scalar_select %p191, %s22, 0
        %s193 = smul.addr %s192, 8
        %s194 = scalar_lea.vmem %s2, %s193
        %p195 = pneg %p102
        %p196 = pneg %p99
        %p197 = pneg %p130
        %p198 = pneg %p127
        %s199 = sand.u32 %s117, 1
        %s200 = scalar_lea.sflag [#allocation3], %s199
        %s201 = sand.u32 %s117, 1
        %s202 = smul.addr %s201, 24
        %s203 = scalar_lea.vmem [#allocation2], %s202
        %p204 = scmp.lt.s32.totalorder %s22, 0
        %s205 = scalar_select %p204, %s22, 0
        %s206 = smul.addr %s205, 4
        %s207 = scalar_lea.vmem %s0, %s206
        %p208 = scmp.lt.s32.totalorder %s21, 1
        %s209 = scalar_select %p208, %s21, 1
        %s210 = smul.addr %s209, 3
        %s211 = smul.addr %s210, 2
        %s212 = scalar_lea.vmem %s1, %s211
        %p213 = scmp.lt.s32.totalorder %s22, 0
        %s214 = scalar_select %p213, %s22, 0
        %s215 = smul.addr %s214, 8
        %s216 = scalar_lea.vmem %s2, %s215
        %v218 = vld [vmem:[%s207] sm:$0xf]
        %v219 = vld [vmem:[%s212] sm:$0x3f]
        %s220 = scalar_lea.vmem %s207, 4
        %v221 = vld [vmem:[%s220] sm:$0xf]
        %v223 = vcombine.high %v219, %v219
        %v225 = vunpack.c.l.s4 1983009808
        %v226 = vunpack.c.0.s8 %v225
        %v227 = vlaneseq
        %v228 = vshrl.u32 %v227, 7
        %v229 = vsub.s32 %v226, %v228
        %v230 = vrot.slane %v219, %v229
        %v232 = vunpack.c.l.s4 1983009808
        %v233 = vunpack.c.0.s8 %v232
        %v234 = vlaneseq
        %v235 = vshrl.u32 %v234, 7
        %v236 = vsub.s32 %v233, %v235
        %v237 = vrot.slane %v223, %v236
        %v238 = vcombine.high %v230, %v230
        %239 = vrot.lane.b32.xlu0 %v230, 127
        %v240 = vpop.permute.xlu0 %239
        %241 = vrot.lane.b32.xlu0 %v238, 127
        %v242 = vpop.permute.xlu0 %241
        %243 = vrot.lane.b32.xlu0 %v237, 127
        %v244 = vpop.permute.xlu0 %243
        %vm245 = vcmask 1039360
        %v246 = vsel %vm245, %v240, %v242
        %v247 = vsel %vm245, %v242, %v244
        %vm248 = vcmask 31744
        %v250 = vsel %vm248, %v221, 0
        %vm252 = vcmask 1041408
        %v254 = vsel %vm252, %v246, 0
        %v257 = vsel %vm252, %v247, 0
        %v260 = vsel %vm252, %v244, 0
        %262 = vmatprep.subr.bf16.mxu0 0
        %263 = vmatpush1.bf16.msra.mxu0 0
        %264 = vmatprep.subr.bf16.mxu0 0
        %265 = vmatpush1.bf16.msra.mxu0 0
        %266 = vmatprep.subr.bf16.mxu0 0
        %267 = vmatpush1.bf16.msra.mxu0 0
        %268 = vmatprep.subr.bf16.mxu0 0
        %269 = vmatpush1.bf16.msra.mxu0 0
        %270 = vmatprep.subr.bf16.mxu0 0
        %271 = vmatpush1.bf16.msra.mxu0 0
        %272 = vmatprep.subr.bf16.mxu0 0
        %273 = vmatpush1.bf16.msra.mxu0 0
        %274 = vmatprep.subr.bf16.mxu0 0
        %275 = vmatpush1.bf16.msra.mxu0 0
        %276 = vmatprep.subr.bf16.mxu0 %v257
        %277 = vmatpush1.bf16.msra.mxu0 %v254
        %278 = vmatprep.subr.bf16.mxu0 0
        %279 = vmatpush2.bf16.msra.mxu0 0
        %280 = vmatprep.subr.bf16.mxu0 0
        %281 = vmatpush2.bf16.msra.mxu0 0
        %282 = vmatprep.subr.bf16.mxu0 0
        %283 = vmatpush2.bf16.msra.mxu0 0
        %284 = vmatprep.subr.bf16.mxu0 0
        %285 = vmatpush2.bf16.msra.mxu0 0
        %286 = vmatprep.subr.bf16.mxu0 0
        %287 = vmatpush2.bf16.msra.mxu0 0
        %288 = vmatprep.subr.bf16.mxu0 0
        %289 = vmatpush2.bf16.msra.mxu0 0
        %290 = vmatprep.subr.bf16.mxu0 0
        %291 = vmatpush2.bf16.msra.mxu0 0
        %292 = vmatprep.subr.bf16.mxu0 0
        %293 = vmatpush2.bf16.msra.mxu0 0
        %294 = vmatprep.mubr.bf16.mxu0 0
        %295 = vmatmul.mubr.bf16.gmra.mxu0 %v250
        %v296 = vpop.f32.mrf.mxu0
        %v297 = vadd.f32 0.0, %v296
        %v298 = vpop.f32.mrf.mxu0
        %v299 = vadd.f32 0.0, %v298
        %v300 = vpop.f32.mrf.mxu0
        %v301 = vpop.f32.mrf.mxu0
        %302 = vdwg.mxu0
        %303 = vmatprep.subr.bf16.mxu0 0
        %304 = vmatpush1.bf16.msra.mxu0 0
        %305 = vmatprep.subr.bf16.mxu0 0
        %306 = vmatpush1.bf16.msra.mxu0 0
        %307 = vmatprep.subr.bf16.mxu0 0
        %308 = vmatpush1.bf16.msra.mxu0 0
        %309 = vmatprep.subr.bf16.mxu0 0
        %310 = vmatpush1.bf16.msra.mxu0 0
        %311 = vmatprep.subr.bf16.mxu0 0
        %312 = vmatpush1.bf16.msra.mxu0 0
        %313 = vmatprep.subr.bf16.mxu0 0
        %314 = vmatpush1.bf16.msra.mxu0 0
        %315 = vmatprep.subr.bf16.mxu0 0
        %316 = vmatpush1.bf16.msra.mxu0 0
        %317 = vmatprep.subr.bf16.mxu0 0
        %318 = vmatpush1.bf16.msra.mxu0 %v260
        %319 = vmatprep.subr.bf16.mxu0 0
        %320 = vmatpush2.bf16.msra.mxu0 0
        %321 = vmatprep.subr.bf16.mxu0 0
        %322 = vmatpush2.bf16.msra.mxu0 0
        %323 = vmatprep.subr.bf16.mxu0 0
        %324 = vmatpush2.bf16.msra.mxu0 0
        %325 = vmatprep.subr.bf16.mxu0 0
        %326 = vmatpush2.bf16.msra.mxu0 0
        %327 = vmatprep.subr.bf16.mxu0 0
        %328 = vmatpush2.bf16.msra.mxu0 0
        %329 = vmatprep.subr.bf16.mxu0 0
        %330 = vmatpush2.bf16.msra.mxu0 0
        %331 = vmatprep.subr.bf16.mxu0 0
        %332 = vmatpush2.bf16.msra.mxu0 0
        %333 = vmatprep.subr.bf16.mxu0 0
        %334 = vmatpush2.bf16.msra.mxu0 0
        %335 = vmatprep.mubr.bf16.mxu0 0
        %336 = vmatmul.mubr.bf16.gmra.mxu0 %v250
        %v337 = vpop.f32.mrf.mxu0
        %v338 = vadd.f32 0.0, %v337
        %v339 = vpop.f32.mrf.mxu0
        %v340 = vpop.f32.mrf.mxu0
        %v341 = vpop.f32.mrf.mxu0
        %342 = vdwg.mxu0
        %v344 = vsel %vm248, %v218, 0
        %v347 = vsel %vm252, %v230, 0
        %v350 = vsel %vm252, %v238, 0
        %v353 = vsel %vm252, %v237, 0
        %355 = vmatprep.subr.bf16.mxu0 0
        %356 = vmatpush1.bf16.msra.mxu0 0
        %357 = vmatprep.subr.bf16.mxu0 0
        %358 = vmatpush1.bf16.msra.mxu0 0
        %359 = vmatprep.subr.bf16.mxu0 0
        %360 = vmatpush1.bf16.msra.mxu0 0
        %361 = vmatprep.subr.bf16.mxu0 0
        %362 = vmatpush1.bf16.msra.mxu0 0
        %363 = vmatprep.subr.bf16.mxu0 0
        %364 = vmatpush1.bf16.msra.mxu0 0
        %365 = vmatprep.subr.bf16.mxu0 0
        %366 = vmatpush1.bf16.msra.mxu0 0
        %367 = vmatprep.subr.bf16.mxu0 0
        %368 = vmatpush1.bf16.msra.mxu0 0
        %369 = vmatprep.subr.bf16.mxu0 %v350
        %370 = vmatpush1.bf16.msra.mxu0 %v347
        %371 = vmatprep.subr.bf16.mxu0 0
        %372 = vmatpush2.bf16.msra.mxu0 0
        %373 = vmatprep.subr.bf16.mxu0 0
        %374 = vmatpush2.bf16.msra.mxu0 0
        %375 = vmatprep.subr.bf16.mxu0 0
        %376 = vmatpush2.bf16.msra.mxu0 0
        %377 = vmatprep.subr.bf16.mxu0 0
        %378 = vmatpush2.bf16.msra.mxu0 0
        %379 = vmatprep.subr.bf16.mxu0 0
        %380 = vmatpush2.bf16.msra.mxu0 0
        %381 = vmatprep.subr.bf16.mxu0 0
        %382 = vmatpush2.bf16.msra.mxu0 0
        %383 = vmatprep.subr.bf16.mxu0 0
        %384 = vmatpush2.bf16.msra.mxu0 0
        %385 = vmatprep.subr.bf16.mxu0 0
        %386 = vmatpush2.bf16.msra.mxu0 0
        %387 = vmatprep.mubr.bf16.mxu0 0
        %388 = vmatmul.mubr.bf16.gmra.mxu0 %v344
        %v389 = vpop.f32.mrf.mxu0
        %v390 = vadd.f32 %v297, %v389
        %v391 = vpop.f32.mrf.mxu0
        %v392 = vadd.f32 %v299, %v391
        %v393 = vpop.f32.mrf.mxu0
        %v394 = vpop.f32.mrf.mxu0
        %395 = vdwg.mxu0
        %396 = vmatprep.subr.bf16.mxu0 0
        %397 = vmatpush1.bf16.msra.mxu0 0
        %398 = vmatprep.subr.bf16.mxu0 0
        %399 = vmatpush1.bf16.msra.mxu0 0
        %400 = vmatprep.subr.bf16.mxu0 0
        %401 = vmatpush1.bf16.msra.mxu0 0
        %402 = vmatprep.subr.bf16.mxu0 0
        %403 = vmatpush1.bf16.msra.mxu0 0
        %404 = vmatprep.subr.bf16.mxu0 0
        %405 = vmatpush1.bf16.msra.mxu0 0
        %406 = vmatprep.subr.bf16.mxu0 0
        %407 = vmatpush1.bf16.msra.mxu0 0
        %408 = vmatprep.subr.bf16.mxu0 0
        %409 = vmatpush1.bf16.msra.mxu0 0
        %410 = vmatprep.subr.bf16.mxu0 0
        %411 = vmatpush1.bf16.msra.mxu0 %v353
        %412 = vmatprep.subr.bf16.mxu0 0
        %413 = vmatpush2.bf16.msra.mxu0 0
        %414 = vmatprep.subr.bf16.mxu0 0
        %415 = vmatpush2.bf16.msra.mxu0 0
        %416 = vmatprep.subr.bf16.mxu0 0
        %417 = vmatpush2.bf16.msra.mxu0 0
        %418 = vmatprep.subr.bf16.mxu0 0
        %419 = vmatpush2.bf16.msra.mxu0 0
        %420 = vmatprep.subr.bf16.mxu0 0
        %421 = vmatpush2.bf16.msra.mxu0 0
        %422 = vmatprep.subr.bf16.mxu0 0
        %423 = vmatpush2.bf16.msra.mxu0 0
        %424 = vmatprep.subr.bf16.mxu0 0
        %425 = vmatpush2.bf16.msra.mxu0 0
        %426 = vmatprep.subr.bf16.mxu0 0
        %427 = vmatpush2.bf16.msra.mxu0 0
        %428 = vmatprep.mubr.bf16.mxu0 0
        %429 = vmatmul.mubr.bf16.gmra.mxu0 %v344
        %v430 = vpop.f32.mrf.mxu0
        %v431 = vadd.f32 %v338, %v430
        %v432 = vpop.f32.mrf.mxu0
        %v433 = vpop.f32.mrf.mxu0
        %v434 = vpop.f32.mrf.mxu0
        %435 = vdwg.mxu0
        %s436 = scalar_lea.vmem %s207, 8
        %v437 = vld [vmem:[%s436] sm:$0xf]
        %v438 = vld [vmem:[%s212] sm:$0x3f]
        %v440 = vcombine.high %v438, %v438
        %v442 = vunpack.c.l.s4 1983009808
        %v443 = vunpack.c.0.s8 %v442
        %v444 = vlaneseq
        %v445 = vshrl.u32 %v444, 7
        %v446 = vsub.s32 %v443, %v445
        %v447 = vrot.slane %v438, %v446
        %v449 = vunpack.c.l.s4 1983009808
        %v450 = vunpack.c.0.s8 %v449
        %v451 = vlaneseq
        %v452 = vshrl.u32 %v451, 7
        %v453 = vsub.s32 %v450, %v452
        %v454 = vrot.slane %v440, %v453
        %v455 = vcombine.high %v447, %v447
        %456 = vrot.lane.b32.xlu0 %v447, 126
        %v457 = vpop.permute.xlu0 %456
        %458 = vrot.lane.b32.xlu0 %v455, 126
        %v459 = vpop.permute.xlu0 %458
        %460 = vrot.lane.b32.xlu0 %v454, 126
        %v461 = vpop.permute.xlu0 %460
        %vm462 = vcmask 1031168
        %v463 = vsel %vm462, %v457, %v459
        %v464 = vsel %vm462, %v459, %v461
        %v466 = vsel %vm248, %v437, 0
        %v469 = vsel %vm252, %v463, 0
        %v472 = vsel %vm252, %v464, 0
        %v475 = vsel %vm252, %v461, 0
        %477 = vmatprep.subr.bf16.mxu0 0
        %478 = vmatpush1.bf16.msra.mxu0 0
        %479 = vmatprep.subr.bf16.mxu0 0
        %480 = vmatpush1.bf16.msra.mxu0 0
        %481 = vmatprep.subr.bf16.mxu0 0
        %482 = vmatpush1.bf16.msra.mxu0 0
        %483 = vmatprep.subr.bf16.mxu0 0
        %484 = vmatpush1.bf16.msra.mxu0 0
        %485 = vmatprep.subr.bf16.mxu0 0
        %486 = vmatpush1.bf16.msra.mxu0 0
        %487 = vmatprep.subr.bf16.mxu0 0
        %488 = vmatpush1.bf16.msra.mxu0 0
        %489 = vmatprep.subr.bf16.mxu0 0
        %490 = vmatpush1.bf16.msra.mxu0 0
        %491 = vmatprep.subr.bf16.mxu0 %v472
        %492 = vmatpush1.bf16.msra.mxu0 %v469
        %493 = vmatprep.subr.bf16.mxu0 0
        %494 = vmatpush2.bf16.msra.mxu0 0
        %495 = vmatprep.subr.bf16.mxu0 0
        %496 = vmatpush2.bf16.msra.mxu0 0
        %497 = vmatprep.subr.bf16.mxu0 0
        %498 = vmatpush2.bf16.msra.mxu0 0
        %499 = vmatprep.subr.bf16.mxu0 0
        %500 = vmatpush2.bf16.msra.mxu0 0
        %501 = vmatprep.subr.bf16.mxu0 0
        %502 = vmatpush2.bf16.msra.mxu0 0
        %503 = vmatprep.subr.bf16.mxu0 0
        %504 = vmatpush2.bf16.msra.mxu0 0
        %505 = vmatprep.subr.bf16.mxu0 0
        %506 = vmatpush2.bf16.msra.mxu0 0
        %507 = vmatprep.subr.bf16.mxu0 0
        %508 = vmatpush2.bf16.msra.mxu0 0
        %509 = vmatprep.mubr.bf16.mxu0 0
        %510 = vmatmul.mubr.bf16.gmra.mxu0 %v466
        %v511 = vpop.f32.mrf.mxu0
        %v512 = vadd.f32 0.0, %v511
        %v513 = vpop.f32.mrf.mxu0
        %v514 = vadd.f32 0.0, %v513
        %v515 = vpop.f32.mrf.mxu0
        %v516 = vpop.f32.mrf.mxu0
        %517 = vdwg.mxu0
        %518 = vmatprep.subr.bf16.mxu0 0
        %519 = vmatpush1.bf16.msra.mxu0 0
        %520 = vmatprep.subr.bf16.mxu0 0
        %521 = vmatpush1.bf16.msra.mxu0 0
        %522 = vmatprep.subr.bf16.mxu0 0
        %523 = vmatpush1.bf16.msra.mxu0 0
        %524 = vmatprep.subr.bf16.mxu0 0
        %525 = vmatpush1.bf16.msra.mxu0 0
        %526 = vmatprep.subr.bf16.mxu0 0
        %527 = vmatpush1.bf16.msra.mxu0 0
        %528 = vmatprep.subr.bf16.mxu0 0
        %529 = vmatpush1.bf16.msra.mxu0 0
        %530 = vmatprep.subr.bf16.mxu0 0
        %531 = vmatpush1.bf16.msra.mxu0 0
        %532 = vmatprep.subr.bf16.mxu0 0
        %533 = vmatpush1.bf16.msra.mxu0 %v475
        %534 = vmatprep.subr.bf16.mxu0 0
        %535 = vmatpush2.bf16.msra.mxu0 0
        %536 = vmatprep.subr.bf16.mxu0 0
        %537 = vmatpush2.bf16.msra.mxu0 0
        %538 = vmatprep.subr.bf16.mxu0 0
        %539 = vmatpush2.bf16.msra.mxu0 0
        %540 = vmatprep.subr.bf16.mxu0 0
        %541 = vmatpush2.bf16.msra.mxu0 0
        %542 = vmatprep.subr.bf16.mxu0 0
        %543 = vmatpush2.bf16.msra.mxu0 0
        %544 = vmatprep.subr.bf16.mxu0 0
        %545 = vmatpush2.bf16.msra.mxu0 0
        %546 = vmatprep.subr.bf16.mxu0 0
        %547 = vmatpush2.bf16.msra.mxu0 0
        %548 = vmatprep.subr.bf16.mxu0 0
        %549 = vmatpush2.bf16.msra.mxu0 0
        %550 = vmatprep.mubr.bf16.mxu0 0
        %551 = vmatmul.mubr.bf16.gmra.mxu0 %v466
        %v552 = vpop.f32.mrf.mxu0
        %v553 = vadd.f32 0.0, %v552
        %v554 = vpop.f32.mrf.mxu0
        %v555 = vpop.f32.mrf.mxu0
        %v556 = vpop.f32.mrf.mxu0
        %557 = vdwg.mxu0
        %v558 = vadd.f32 %v390, %v512
        %v559 = vadd.f32 %v392, %v514
        %v560 = vadd.f32 %v431, %v553
        %s561 = scalar_lea.vmem %s207, 12
        %v562 = vld [vmem:[%s561] sm:$0xf]
        %v563 = vld [vmem:[%s212] sm:$0x3f]
        %v565 = vcombine.high %v563, %v563
        %v567 = vunpack.c.l.s4 1983009808
        %v568 = vunpack.c.0.s8 %v567
        %v569 = vlaneseq
        %v570 = vshrl.u32 %v569, 7
        %v571 = vsub.s32 %v568, %v570
        %v572 = vrot.slane %v563, %v571
        %v574 = vunpack.c.l.s4 1983009808
        %v575 = vunpack.c.0.s8 %v574
        %v576 = vlaneseq
        %v577 = vshrl.u32 %v576, 7
        %v578 = vsub.s32 %v575, %v577
        %v579 = vrot.slane %v565, %v578
        %v580 = vcombine.high %v572, %v572
        %581 = vrot.lane.b32.xlu0 %v572, 110
        %v582 = vpop.permute.xlu0 %581
        %583 = vrot.lane.b32.xlu0 %v580, 110
        %v584 = vpop.permute.xlu0 %583
        %585 = vrot.lane.b32.xlu0 %v579, 110
        %v586 = vpop.permute.xlu0 %585
        %vm587 = vcmask 900096
        %v588 = vsel %vm587, %v582, %v584
        %v589 = vsel %vm587, %v584, %v586
        %v591 = vsel %vm248, %v562, 0
        %v594 = vsel %vm252, %v588, 0
        %v597 = vsel %vm252, %v589, 0
        %v600 = vsel %vm252, %v586, 0
        %602 = vmatprep.subr.bf16.mxu0 0
        %603 = vmatpush1.bf16.msra.mxu0 0
        %604 = vmatprep.subr.bf16.mxu0 0
        %605 = vmatpush1.bf16.msra.mxu0 0
        %606 = vmatprep.subr.bf16.mxu0 0
        %607 = vmatpush1.bf16.msra.mxu0 0
        %608 = vmatprep.subr.bf16.mxu0 0
        %609 = vmatpush1.bf16.msra.mxu0 0
        %610 = vmatprep.subr.bf16.mxu0 0
        %611 = vmatpush1.bf16.msra.mxu0 0
        %612 = vmatprep.subr.bf16.mxu0 0
        %613 = vmatpush1.bf16.msra.mxu0 0
        %614 = vmatprep.subr.bf16.mxu0 0
        %615 = vmatpush1.bf16.msra.mxu0 0
        %616 = vmatprep.subr.bf16.mxu0 %v597
        %617 = vmatpush1.bf16.msra.mxu0 %v594
        %618 = vmatprep.subr.bf16.mxu0 0
        %619 = vmatpush2.bf16.msra.mxu0 0
        %620 = vmatprep.subr.bf16.mxu0 0
        %621 = vmatpush2.bf16.msra.mxu0 0
        %622 = vmatprep.subr.bf16.mxu0 0
        %623 = vmatpush2.bf16.msra.mxu0 0
        %624 = vmatprep.subr.bf16.mxu0 0
        %625 = vmatpush2.bf16.msra.mxu0 0
        %626 = vmatprep.subr.bf16.mxu0 0
        %627 = vmatpush2.bf16.msra.mxu0 0
        %628 = vmatprep.subr.bf16.mxu0 0
        %629 = vmatpush2.bf16.msra.mxu0 0
        %630 = vmatprep.subr.bf16.mxu0 0
        %631 = vmatpush2.bf16.msra.mxu0 0
        %632 = vmatprep.subr.bf16.mxu0 0
        %633 = vmatpush2.bf16.msra.mxu0 0
        %634 = vmatprep.mubr.bf16.mxu0 0
        %635 = vmatmul.mubr.bf16.gmra.mxu0 %v591
        %v636 = vpop.f32.mrf.mxu0
        %v637 = vadd.f32 0.0, %v636
        %v638 = vpop.f32.mrf.mxu0
        %v639 = vadd.f32 0.0, %v638
        %v640 = vpop.f32.mrf.mxu0
        %v641 = vpop.f32.mrf.mxu0
        %642 = vdwg.mxu0
        %643 = vmatprep.subr.bf16.mxu0 0
        %644 = vmatpush1.bf16.msra.mxu0 0
        %645 = vmatprep.subr.bf16.mxu0 0
        %646 = vmatpush1.bf16.msra.mxu0 0
        %647 = vmatprep.subr.bf16.mxu0 0
        %648 = vmatpush1.bf16.msra.mxu0 0
        %649 = vmatprep.subr.bf16.mxu0 0
        %650 = vmatpush1.bf16.msra.mxu0 0
        %651 = vmatprep.subr.bf16.mxu0 0
        %652 = vmatpush1.bf16.msra.mxu0 0
        %653 = vmatprep.subr.bf16.mxu0 0
        %654 = vmatpush1.bf16.msra.mxu0 0
        %655 = vmatprep.subr.bf16.mxu0 0
        %656 = vmatpush1.bf16.msra.mxu0 0
        %657 = vmatprep.subr.bf16.mxu0 0
        %658 = vmatpush1.bf16.msra.mxu0 %v600
        %659 = vmatprep.subr.bf16.mxu0 0
        %660 = vmatpush2.bf16.msra.mxu0 0
        %661 = vmatprep.subr.bf16.mxu0 0
        %662 = vmatpush2.bf16.msra.mxu0 0
        %663 = vmatprep.subr.bf16.mxu0 0
        %664 = vmatpush2.bf16.msra.mxu0 0
        %665 = vmatprep.subr.bf16.mxu0 0
        %666 = vmatpush2.bf16.msra.mxu0 0
        %667 = vmatprep.subr.bf16.mxu0 0
        %668 = vmatpush2.bf16.msra.mxu0 0
        %669 = vmatprep.subr.bf16.mxu0 0
        %670 = vmatpush2.bf16.msra.mxu0 0
        %671 = vmatprep.subr.bf16.mxu0 0
        %672 = vmatpush2.bf16.msra.mxu0 0
        %673 = vmatprep.subr.bf16.mxu0 0
        %674 = vmatpush2.bf16.msra.mxu0 0
        %675 = vmatprep.mubr.bf16.mxu0 0
        %676 = vmatmul.mubr.bf16.gmra.mxu0 %v591
        %v677 = vpop.f32.mrf.mxu0
        %v678 = vadd.f32 0.0, %v677
        %v679 = vpop.f32.mrf.mxu0
        %v680 = vpop.f32.mrf.mxu0
        %v681 = vpop.f32.mrf.mxu0
        %682 = vdwg.mxu0
        %v683 = vadd.f32 %v558, %v637
        %v684 = vadd.f32 %v559, %v639
        %v685 = vadd.f32 %v560, %v678
        %s686 = scalar_lea.vmem %s207, 16
        %v687 = vld [vmem:[%s686] sm:$0xf]
        %v688 = vld [vmem:[%s212] sm:$0x3f]
        %v690 = vcombine.high %v688, %v688
        %v692 = vunpack.c.l.s4 1983009808
        %v693 = vunpack.c.0.s8 %v692
        %v694 = vlaneseq
        %v695 = vshrl.u32 %v694, 7
        %v696 = vsub.s32 %v693, %v695
        %v697 = vrot.slane %v688, %v696
        %v699 = vunpack.c.l.s4 1983009808
        %v700 = vunpack.c.0.s8 %v699
        %v701 = vlaneseq
        %v702 = vshrl.u32 %v701, 7
        %v703 = vsub.s32 %v700, %v702
        %v704 = vrot.slane %v690, %v703
        %v705 = vcombine.high %v697, %v697
        %706 = vrot.lane.b32.xlu0 %v697, 109
        %v707 = vpop.permute.xlu0 %706
        %708 = vrot.lane.b32.xlu0 %v705, 109
        %v709 = vpop.permute.xlu0 %708
        %710 = vrot.lane.b32.xlu0 %v704, 109
        %v711 = vpop.permute.xlu0 %710
        %vm712 = vcmask 891904
        %v713 = vsel %vm712, %v707, %v709
        %v714 = vsel %vm712, %v709, %v711
        %v716 = vsel %vm248, %v687, 0
        %v719 = vsel %vm252, %v713, 0
        %v722 = vsel %vm252, %v714, 0
        %v725 = vsel %vm252, %v711, 0
        %727 = vmatprep.subr.bf16.mxu0 0
        %728 = vmatpush1.bf16.msra.mxu0 0
        %729 = vmatprep.subr.bf16.mxu0 0
        %730 = vmatpush1.bf16.msra.mxu0 0
        %731 = vmatprep.subr.bf16.mxu0 0
        %732 = vmatpush1.bf16.msra.mxu0 0
        %733 = vmatprep.subr.bf16.mxu0 0
        %734 = vmatpush1.bf16.msra.mxu0 0
        %735 = vmatprep.subr.bf16.mxu0 0
        %736 = vmatpush1.bf16.msra.mxu0 0
        %737 = vmatprep.subr.bf16.mxu0 0
        %738 = vmatpush1.bf16.msra.mxu0 0
        %739 = vmatprep.subr.bf16.mxu0 0
        %740 = vmatpush1.bf16.msra.mxu0 0
        %741 = vmatprep.subr.bf16.mxu0 %v722
        %742 = vmatpush1.bf16.msra.mxu0 %v719
        %743 = vmatprep.subr.bf16.mxu0 0
        %744 = vmatpush2.bf16.msra.mxu0 0
        %745 = vmatprep.subr.bf16.mxu0 0
        %746 = vmatpush2.bf16.msra.mxu0 0
        %747 = vmatprep.subr.bf16.mxu0 0
        %748 = vmatpush2.bf16.msra.mxu0 0
        %749 = vmatprep.subr.bf16.mxu0 0
        %750 = vmatpush2.bf16.msra.mxu0 0
        %751 = vmatprep.subr.bf16.mxu0 0
        %752 = vmatpush2.bf16.msra.mxu0 0
        %753 = vmatprep.subr.bf16.mxu0 0
        %754 = vmatpush2.bf16.msra.mxu0 0
        %755 = vmatprep.subr.bf16.mxu0 0
        %756 = vmatpush2.bf16.msra.mxu0 0
        %757 = vmatprep.subr.bf16.mxu0 0
        %758 = vmatpush2.bf16.msra.mxu0 0
        %759 = vmatprep.mubr.bf16.mxu0 0
        %760 = vmatmul.mubr.bf16.gmra.mxu0 %v716
        %v761 = vpop.f32.mrf.mxu0
        %v762 = vadd.f32 0.0, %v761
        %v763 = vpop.f32.mrf.mxu0
        %v764 = vadd.f32 0.0, %v763
        %v765 = vpop.f32.mrf.mxu0
        %v766 = vpop.f32.mrf.mxu0
        %767 = vdwg.mxu0
        %768 = vmatprep.subr.bf16.mxu0 0
        %769 = vmatpush1.bf16.msra.mxu0 0
        %770 = vmatprep.subr.bf16.mxu0 0
        %771 = vmatpush1.bf16.msra.mxu0 0
        %772 = vmatprep.subr.bf16.mxu0 0
        %773 = vmatpush1.bf16.msra.mxu0 0
        %774 = vmatprep.subr.bf16.mxu0 0
        %775 = vmatpush1.bf16.msra.mxu0 0
        %776 = vmatprep.subr.bf16.mxu0 0
        %777 = vmatpush1.bf16.msra.mxu0 0
        %778 = vmatprep.subr.bf16.mxu0 0
        %779 = vmatpush1.bf16.msra.mxu0 0
        %780 = vmatprep.subr.bf16.mxu0 0
        %781 = vmatpush1.bf16.msra.mxu0 0
        %782 = vmatprep.subr.bf16.mxu0 0
        %783 = vmatpush1.bf16.msra.mxu0 %v725
        %784 = vmatprep.subr.bf16.mxu0 0
        %785 = vmatpush2.bf16.msra.mxu0 0
        %786 = vmatprep.subr.bf16.mxu0 0
        %787 = vmatpush2.bf16.msra.mxu0 0
        %788 = vmatprep.subr.bf16.mxu0 0
        %789 = vmatpush2.bf16.msra.mxu0 0
        %790 = vmatprep.subr.bf16.mxu0 0
        %791 = vmatpush2.bf16.msra.mxu0 0
        %792 = vmatprep.subr.bf16.mxu0 0
        %793 = vmatpush2.bf16.msra.mxu0 0
        %794 = vmatprep.subr.bf16.mxu0 0
        %795 = vmatpush2.bf16.msra.mxu0 0
        %796 = vmatprep.subr.bf16.mxu0 0
        %797 = vmatpush2.bf16.msra.mxu0 0
        %798 = vmatprep.subr.bf16.mxu0 0
        %799 = vmatpush2.bf16.msra.mxu0 0
        %800 = vmatprep.mubr.bf16.mxu0 0
        %801 = vmatmul.mubr.bf16.gmra.mxu0 %v716
        %v802 = vpop.f32.mrf.mxu0
        %v803 = vadd.f32 0.0, %v802
        %v804 = vpop.f32.mrf.mxu0
        %v805 = vpop.f32.mrf.mxu0
        %v806 = vpop.f32.mrf.mxu0
        %807 = vdwg.mxu0
        %v808 = vadd.f32 %v683, %v762
        %v809 = vadd.f32 %v684, %v764
        %v810 = vadd.f32 %v685, %v803
        %s811 = scalar_lea.vmem %s207, 20
        %v812 = vld [vmem:[%s811] sm:$0xf]
        %v813 = vld [vmem:[%s212] sm:$0x3f]
        %v815 = vcombine.high %v813, %v813
        %v817 = vunpack.c.l.s4 1983009808
        %v818 = vunpack.c.0.s8 %v817
        %v819 = vlaneseq
        %v820 = vshrl.u32 %v819, 7
        %v821 = vsub.s32 %v818, %v820
        %v822 = vrot.slane %v813, %v821
        %v824 = vunpack.c.l.s4 1983009808
        %v825 = vunpack.c.0.s8 %v824
        %v826 = vlaneseq
        %v827 = vshrl.u32 %v826, 7
        %v828 = vsub.s32 %v825, %v827
        %v829 = vrot.slane %v815, %v828
        %v830 = vcombine.high %v822, %v822
        %831 = vrot.lane.b32.xlu0 %v822, 108
        %v832 = vpop.permute.xlu0 %831
        %833 = vrot.lane.b32.xlu0 %v830, 108
        %v834 = vpop.permute.xlu0 %833
        %835 = vrot.lane.b32.xlu0 %v829, 108
        %v836 = vpop.permute.xlu0 %835
        %vm837 = vcmask 883712
        %v838 = vsel %vm837, %v832, %v834
        %v839 = vsel %vm837, %v834, %v836
        %v841 = vsel %vm248, %v812, 0
        %v844 = vsel %vm252, %v838, 0
        %v847 = vsel %vm252, %v839, 0
        %v850 = vsel %vm252, %v836, 0
        %852 = vmatprep.subr.bf16.mxu0 0
        %853 = vmatpush1.bf16.msra.mxu0 0
        %854 = vmatprep.subr.bf16.mxu0 0
        %855 = vmatpush1.bf16.msra.mxu0 0
        %856 = vmatprep.subr.bf16.mxu0 0
        %857 = vmatpush1.bf16.msra.mxu0 0
        %858 = vmatprep.subr.bf16.mxu0 0
        %859 = vmatpush1.bf16.msra.mxu0 0
        %860 = vmatprep.subr.bf16.mxu0 0
        %861 = vmatpush1.bf16.msra.mxu0 0
        %862 = vmatprep.subr.bf16.mxu0 0
        %863 = vmatpush1.bf16.msra.mxu0 0
        %864 = vmatprep.subr.bf16.mxu0 0
        %865 = vmatpush1.bf16.msra.mxu0 0
        %866 = vmatprep.subr.bf16.mxu0 %v847
        %867 = vmatpush1.bf16.msra.mxu0 %v844
        %868 = vmatprep.subr.bf16.mxu0 0
        %869 = vmatpush2.bf16.msra.mxu0 0
        %870 = vmatprep.subr.bf16.mxu0 0
        %871 = vmatpush2.bf16.msra.mxu0 0
        %872 = vmatprep.subr.bf16.mxu0 0
        %873 = vmatpush2.bf16.msra.mxu0 0
        %874 = vmatprep.subr.bf16.mxu0 0
        %875 = vmatpush2.bf16.msra.mxu0 0
        %876 = vmatprep.subr.bf16.mxu0 0
        %877 = vmatpush2.bf16.msra.mxu0 0
        %878 = vmatprep.subr.bf16.mxu0 0
        %879 = vmatpush2.bf16.msra.mxu0 0
        %880 = vmatprep.subr.bf16.mxu0 0
        %881 = vmatpush2.bf16.msra.mxu0 0
        %882 = vmatprep.subr.bf16.mxu0 0
        %883 = vmatpush2.bf16.msra.mxu0 0
        %884 = vmatprep.mubr.bf16.mxu0 0
        %885 = vmatmul.mubr.bf16.gmra.mxu0 %v841
        %v886 = vpop.f32.mrf.mxu0
        %v887 = vadd.f32 0.0, %v886
        %v888 = vpop.f32.mrf.mxu0
        %v889 = vadd.f32 0.0, %v888
        %v890 = vpop.f32.mrf.mxu0
        %v891 = vpop.f32.mrf.mxu0
        %892 = vdwg.mxu0
        %893 = vmatprep.subr.bf16.mxu0 0
        %894 = vmatpush1.bf16.msra.mxu0 0
        %895 = vmatprep.subr.bf16.mxu0 0
        %896 = vmatpush1.bf16.msra.mxu0 0
        %897 = vmatprep.subr.bf16.mxu0 0
        %898 = vmatpush1.bf16.msra.mxu0 0
        %899 = vmatprep.subr.bf16.mxu0 0
        %900 = vmatpush1.bf16.msra.mxu0 0
        %901 = vmatprep.subr.bf16.mxu0 0
        %902 = vmatpush1.bf16.msra.mxu0 0
        %903 = vmatprep.subr.bf16.mxu0 0
        %904 = vmatpush1.bf16.msra.mxu0 0
        %905 = vmatprep.subr.bf16.mxu0 0
        %906 = vmatpush1.bf16.msra.mxu0 0
        %907 = vmatprep.subr.bf16.mxu0 0
        %908 = vmatpush1.bf16.msra.mxu0 %v850
        %909 = vmatprep.subr.bf16.mxu0 0
        %910 = vmatpush2.bf16.msra.mxu0 0
        %911 = vmatprep.subr.bf16.mxu0 0
        %912 = vmatpush2.bf16.msra.mxu0 0
        %913 = vmatprep.subr.bf16.mxu0 0
        %914 = vmatpush2.bf16.msra.mxu0 0
        %915 = vmatprep.subr.bf16.mxu0 0
        %916 = vmatpush2.bf16.msra.mxu0 0
        %917 = vmatprep.subr.bf16.mxu0 0
        %918 = vmatpush2.bf16.msra.mxu0 0
        %919 = vmatprep.subr.bf16.mxu0 0
        %920 = vmatpush2.bf16.msra.mxu0 0
        %921 = vmatprep.subr.bf16.mxu0 0
        %922 = vmatpush2.bf16.msra.mxu0 0
        %923 = vmatprep.subr.bf16.mxu0 0
        %924 = vmatpush2.bf16.msra.mxu0 0
        %925 = vmatprep.mubr.bf16.mxu0 0
        %926 = vmatmul.mubr.bf16.gmra.mxu0 %v841
        %v927 = vpop.f32.mrf.mxu0
        %v928 = vadd.f32 0.0, %v927
        %v929 = vpop.f32.mrf.mxu0
        %v930 = vpop.f32.mrf.mxu0
        %v931 = vpop.f32.mrf.mxu0
        %932 = vdwg.mxu0
        %v933 = vadd.f32 %v808, %v887
        %v934 = vadd.f32 %v809, %v889
        %v935 = vadd.f32 %v810, %v928
        %s936 = scalar_lea.vmem %s207, 24
        %v937 = vld [vmem:[%s936] sm:$0xf]
        %v938 = vld [vmem:[%s212] sm:$0x3f]
        %v940 = vcombine.high %v938, %v938
        %v942 = vunpack.c.l.s4 1983009808
        %v943 = vunpack.c.0.s8 %v942
        %v944 = vlaneseq
        %v945 = vshrl.u32 %v944, 7
        %v946 = vsub.s32 %v943, %v945
        %v947 = vrot.slane %v938, %v946
        %v949 = vunpack.c.l.s4 1983009808
        %v950 = vunpack.c.0.s8 %v949
        %v951 = vlaneseq
        %v952 = vshrl.u32 %v951, 7
        %v953 = vsub.s32 %v950, %v952
        %v954 = vrot.slane %v940, %v953
        %v955 = vcombine.high %v947, %v947
        %956 = vrot.lane.b32.xlu0 %v947, 92
        %v957 = vpop.permute.xlu0 %956
        %958 = vrot.lane.b32.xlu0 %v955, 92
        %v959 = vpop.permute.xlu0 %958
        %960 = vrot.lane.b32.xlu0 %v954, 92
        %v961 = vpop.permute.xlu0 %960
        %vm962 = vcmask 752640
        %v963 = vsel %vm962, %v957, %v959
        %v964 = vsel %vm962, %v959, %v961
        %v966 = vsel %vm248, %v937, 0
        %v969 = vsel %vm252, %v963, 0
        %v972 = vsel %vm252, %v964, 0
        %v975 = vsel %vm252, %v961, 0
        %977 = vmatprep.subr.bf16.mxu0 0
        %978 = vmatpush1.bf16.msra.mxu0 0
        %979 = vmatprep.subr.bf16.mxu0 0
        %980 = vmatpush1.bf16.msra.mxu0 0
        %981 = vmatprep.subr.bf16.mxu0 0
        %982 = vmatpush1.bf16.msra.mxu0 0
        %983 = vmatprep.subr.bf16.mxu0 0
        %984 = vmatpush1.bf16.msra.mxu0 0
        %985 = vmatprep.subr.bf16.mxu0 0
        %986 = vmatpush1.bf16.msra.mxu0 0
        %987 = vmatprep.subr.bf16.mxu0 0
        %988 = vmatpush1.bf16.msra.mxu0 0
        %989 = vmatprep.subr.bf16.mxu0 0
        %990 = vmatpush1.bf16.msra.mxu0 0
        %991 = vmatprep.subr.bf16.mxu0 %v972
        %992 = vmatpush1.bf16.msra.mxu0 %v969
        %993 = vmatprep.subr.bf16.mxu0 0
        %994 = vmatpush2.bf16.msra.mxu0 0
        %995 = vmatprep.subr.bf16.mxu0 0
        %996 = vmatpush2.bf16.msra.mxu0 0
        %997 = vmatprep.subr.bf16.mxu0 0
        %998 = vmatpush2.bf16.msra.mxu0 0
        %999 = vmatprep.subr.bf16.mxu0 0
        %1000 = vmatpush2.bf16.msra.mxu0 0
        %1001 = vmatprep.subr.bf16.mxu0 0
        %1002 = vmatpush2.bf16.msra.mxu0 0
        %1003 = vmatprep.subr.bf16.mxu0 0
        %1004 = vmatpush2.bf16.msra.mxu0 0
        %1005 = vmatprep.subr.bf16.mxu0 0
        %1006 = vmatpush2.bf16.msra.mxu0 0
        %1007 = vmatprep.subr.bf16.mxu0 0
        %1008 = vmatpush2.bf16.msra.mxu0 0
        %1009 = vmatprep.mubr.bf16.mxu0 0
        %1010 = vmatmul.mubr.bf16.gmra.mxu0 %v966
        %v1011 = vpop.f32.mrf.mxu0
        %v1012 = vadd.f32 0.0, %v1011
        %v1013 = vpop.f32.mrf.mxu0
        %v1014 = vadd.f32 0.0, %v1013
        %v1015 = vpop.f32.mrf.mxu0
        %v1016 = vpop.f32.mrf.mxu0
        %1017 = vdwg.mxu0
        %1018 = vmatprep.subr.bf16.mxu0 0
        %1019 = vmatpush1.bf16.msra.mxu0 0
        %1020 = vmatprep.subr.bf16.mxu0 0
        %1021 = vmatpush1.bf16.msra.mxu0 0
        %1022 = vmatprep.subr.bf16.mxu0 0
        %1023 = vmatpush1.bf16.msra.mxu0 0
        %1024 = vmatprep.subr.bf16.mxu0 0
        %1025 = vmatpush1.bf16.msra.mxu0 0
        %1026 = vmatprep.subr.bf16.mxu0 0
        %1027 = vmatpush1.bf16.msra.mxu0 0
        %1028 = vmatprep.subr.bf16.mxu0 0
        %1029 = vmatpush1.bf16.msra.mxu0 0
        %1030 = vmatprep.subr.bf16.mxu0 0
        %1031 = vmatpush1.bf16.msra.mxu0 0
        %1032 = vmatprep.subr.bf16.mxu0 0
        %1033 = vmatpush1.bf16.msra.mxu0 %v975
        %1034 = vmatprep.subr.bf16.mxu0 0
        %1035 = vmatpush2.bf16.msra.mxu0 0
        %1036 = vmatprep.subr.bf16.mxu0 0
        %1037 = vmatpush2.bf16.msra.mxu0 0
        %1038 = vmatprep.subr.bf16.mxu0 0
        %1039 = vmatpush2.bf16.msra.mxu0 0
        %1040 = vmatprep.subr.bf16.mxu0 0
        %1041 = vmatpush2.bf16.msra.mxu0 0
        %1042 = vmatprep.subr.bf16.mxu0 0
        %1043 = vmatpush2.bf16.msra.mxu0 0
        %1044 = vmatprep.subr.bf16.mxu0 0
        %1045 = vmatpush2.bf16.msra.mxu0 0
        %1046 = vmatprep.subr.bf16.mxu0 0
        %1047 = vmatpush2.bf16.msra.mxu0 0
        %1048 = vmatprep.subr.bf16.mxu0 0
        %1049 = vmatpush2.bf16.msra.mxu0 0
        %1050 = vmatprep.mubr.bf16.mxu0 0
        %1051 = vmatmul.mubr.bf16.gmra.mxu0 %v966
        %v1052 = vpop.f32.mrf.mxu0
        %v1053 = vadd.f32 0.0, %v1052
        %v1054 = vpop.f32.mrf.mxu0
        %v1055 = vpop.f32.mrf.mxu0
        %v1056 = vpop.f32.mrf.mxu0
        %1057 = vdwg.mxu0
        %v1058 = vadd.f32 %v933, %v1012
        %v1059 = vadd.f32 %v934, %v1014
        %v1060 = vadd.f32 %v935, %v1053
        %s1061 = scalar_lea.vmem %s207, 28
        %v1062 = vld [vmem:[%s1061] sm:$0xf]
        %v1063 = vld [vmem:[%s212] sm:$0x3f]
        %v1065 = vcombine.high %v1063, %v1063
        %v1067 = vunpack.c.l.s4 1983009808
        %v1068 = vunpack.c.0.s8 %v1067
        %v1069 = vlaneseq
        %v1070 = vshrl.u32 %v1069, 7
        %v1071 = vsub.s32 %v1068, %v1070
        %v1072 = vrot.slane %v1063, %v1071
        %v1074 = vunpack.c.l.s4 1983009808
        %v1075 = vunpack.c.0.s8 %v1074
        %v1076 = vlaneseq
        %v1077 = vshrl.u32 %v1076, 7
        %v1078 = vsub.s32 %v1075, %v1077
        %v1079 = vrot.slane %v1065, %v1078
        %v1080 = vcombine.high %v1072, %v1072
        %1081 = vrot.lane.b32.xlu0 %v1072, 91
        %v1082 = vpop.permute.xlu0 %1081
        %1083 = vrot.lane.b32.xlu0 %v1080, 91
        %v1084 = vpop.permute.xlu0 %1083
        %1085 = vrot.lane.b32.xlu0 %v1079, 91
        %v1086 = vpop.permute.xlu0 %1085
        %vm1087 = vcmask 744448
        %v1088 = vsel %vm1087, %v1082, %v1084
        %v1089 = vsel %vm1087, %v1084, %v1086
        %v1091 = vsel %vm248, %v1062, 0
        %v1094 = vsel %vm252, %v1088, 0
        %v1097 = vsel %vm252, %v1089, 0
        %v1100 = vsel %vm252, %v1086, 0
        %1102 = vmatprep.subr.bf16.mxu0 0
        %1103 = vmatpush1.bf16.msra.mxu0 0
        %1104 = vmatprep.subr.bf16.mxu0 0
        %1105 = vmatpush1.bf16.msra.mxu0 0
        %1106 = vmatprep.subr.bf16.mxu0 0
        %1107 = vmatpush1.bf16.msra.mxu0 0
        %1108 = vmatprep.subr.bf16.mxu0 0
        %1109 = vmatpush1.bf16.msra.mxu0 0
        %1110 = vmatprep.subr.bf16.mxu0 0
        %1111 = vmatpush1.bf16.msra.mxu0 0
        %1112 = vmatprep.subr.bf16.mxu0 0
        %1113 = vmatpush1.bf16.msra.mxu0 0
        %1114 = vmatprep.subr.bf16.mxu0 0
        %1115 = vmatpush1.bf16.msra.mxu0 0
        %1116 = vmatprep.subr.bf16.mxu0 %v1097
        %1117 = vmatpush1.bf16.msra.mxu0 %v1094
        %1118 = vmatprep.subr.bf16.mxu0 0
        %1119 = vmatpush2.bf16.msra.mxu0 0
        %1120 = vmatprep.subr.bf16.mxu0 0
        %1121 = vmatpush2.bf16.msra.mxu0 0
        %1122 = vmatprep.subr.bf16.mxu0 0
        %1123 = vmatpush2.bf16.msra.mxu0 0
        %1124 = vmatprep.subr.bf16.mxu0 0
        %1125 = vmatpush2.bf16.msra.mxu0 0
        %1126 = vmatprep.subr.bf16.mxu0 0
        %1127 = vmatpush2.bf16.msra.mxu0 0
        %1128 = vmatprep.subr.bf16.mxu0 0
        %1129 = vmatpush2.bf16.msra.mxu0 0
        %1130 = vmatprep.subr.bf16.mxu0 0
        %1131 = vmatpush2.bf16.msra.mxu0 0
        %1132 = vmatprep.subr.bf16.mxu0 0
        %1133 = vmatpush2.bf16.msra.mxu0 0
        %1134 = vmatprep.mubr.bf16.mxu0 0
        %1135 = vmatmul.mubr.bf16.gmra.mxu0 %v1091
        %v1136 = vpop.f32.mrf.mxu0
        %v1137 = vadd.f32 0.0, %v1136
        %v1138 = vpop.f32.mrf.mxu0
        %v1139 = vadd.f32 0.0, %v1138
        %v1140 = vpop.f32.mrf.mxu0
        %v1141 = vpop.f32.mrf.mxu0
        %1142 = vdwg.mxu0
        %1143 = vmatprep.subr.bf16.mxu0 0
        %1144 = vmatpush1.bf16.msra.mxu0 0
        %1145 = vmatprep.subr.bf16.mxu0 0
        %1146 = vmatpush1.bf16.msra.mxu0 0
        %1147 = vmatprep.subr.bf16.mxu0 0
        %1148 = vmatpush1.bf16.msra.mxu0 0
        %1149 = vmatprep.subr.bf16.mxu0 0
        %1150 = vmatpush1.bf16.msra.mxu0 0
        %1151 = vmatprep.subr.bf16.mxu0 0
        %1152 = vmatpush1.bf16.msra.mxu0 0
        %1153 = vmatprep.subr.bf16.mxu0 0
        %1154 = vmatpush1.bf16.msra.mxu0 0
        %1155 = vmatprep.subr.bf16.mxu0 0
        %1156 = vmatpush1.bf16.msra.mxu0 0
        %1157 = vmatprep.subr.bf16.mxu0 0
        %1158 = vmatpush1.bf16.msra.mxu0 %v1100
        %1159 = vmatprep.subr.bf16.mxu0 0
        %1160 = vmatpush2.bf16.msra.mxu0 0
        %1161 = vmatprep.subr.bf16.mxu0 0
        %1162 = vmatpush2.bf16.msra.mxu0 0
        %1163 = vmatprep.subr.bf16.mxu0 0
        %1164 = vmatpush2.bf16.msra.mxu0 0
        %1165 = vmatprep.subr.bf16.mxu0 0
        %1166 = vmatpush2.bf16.msra.mxu0 0
        %1167 = vmatprep.subr.bf16.mxu0 0
        %1168 = vmatpush2.bf16.msra.mxu0 0
        %1169 = vmatprep.subr.bf16.mxu0 0
        %1170 = vmatpush2.bf16.msra.mxu0 0
        %1171 = vmatprep.subr.bf16.mxu0 0
        %1172 = vmatpush2.bf16.msra.mxu0 0
        %1173 = vmatprep.subr.bf16.mxu0 0
        %1174 = vmatpush2.bf16.msra.mxu0 0
        %1175 = vmatprep.mubr.bf16.mxu0 0
        %1176 = vmatmul.mubr.bf16.gmra.mxu0 %v1091
        %v1177 = vpop.f32.mrf.mxu0
        %v1178 = vadd.f32 0.0, %v1177
        %v1179 = vpop.f32.mrf.mxu0
        %v1180 = vpop.f32.mrf.mxu0
        %v1181 = vpop.f32.mrf.mxu0
        %1182 = vdwg.mxu0
        %v1183 = vadd.f32 %v1058, %v1137
        %v1184 = vadd.f32 %v1059, %v1139
        %v1185 = vadd.f32 %v1060, %v1178
        %s1186 = scalar_lea.vmem %s207, 32
        %v1187 = vld [vmem:[%s1186] sm:$0xf]
        %v1188 = vld [vmem:[%s212] sm:$0x3f]
        %v1190 = vcombine.high %v1188, %v1188
        %v1192 = vunpack.c.l.s4 1983009808
        %v1193 = vunpack.c.0.s8 %v1192
        %v1194 = vlaneseq
        %v1195 = vshrl.u32 %v1194, 7
        %v1196 = vsub.s32 %v1193, %v1195
        %v1197 = vrot.slane %v1188, %v1196
        %v1199 = vunpack.c.l.s4 1983009808
        %v1200 = vunpack.c.0.s8 %v1199
        %v1201 = vlaneseq
        %v1202 = vshrl.u32 %v1201, 7
        %v1203 = vsub.s32 %v1200, %v1202
        %v1204 = vrot.slane %v1190, %v1203
        %v1205 = vcombine.high %v1197, %v1197
        %1206 = vrot.lane.b32.xlu0 %v1197, 90
        %v1207 = vpop.permute.xlu0 %1206
        %1208 = vrot.lane.b32.xlu0 %v1205, 90
        %v1209 = vpop.permute.xlu0 %1208
        %1210 = vrot.lane.b32.xlu0 %v1204, 90
        %v1211 = vpop.permute.xlu0 %1210
        %vm1212 = vcmask 736256
        %v1213 = vsel %vm1212, %v1207, %v1209
        %v1214 = vsel %vm1212, %v1209, %v1211
        %v1216 = vsel %vm248, %v1187, 0
        %v1219 = vsel %vm252, %v1213, 0
        %v1222 = vsel %vm252, %v1214, 0
        %v1225 = vsel %vm252, %v1211, 0
        %1227 = vmatprep.subr.bf16.mxu0 0
        %1228 = vmatpush1.bf16.msra.mxu0 0
        %1229 = vmatprep.subr.bf16.mxu0 0
        %1230 = vmatpush1.bf16.msra.mxu0 0
        %1231 = vmatprep.subr.bf16.mxu0 0
        %1232 = vmatpush1.bf16.msra.mxu0 0
        %1233 = vmatprep.subr.bf16.mxu0 0
        %1234 = vmatpush1.bf16.msra.mxu0 0
        %1235 = vmatprep.subr.bf16.mxu0 0
        %1236 = vmatpush1.bf16.msra.mxu0 0
        %1237 = vmatprep.subr.bf16.mxu0 0
        %1238 = vmatpush1.bf16.msra.mxu0 0
        %1239 = vmatprep.subr.bf16.mxu0 0
        %1240 = vmatpush1.bf16.msra.mxu0 0
        %1241 = vmatprep.subr.bf16.mxu0 %v1222
        %1242 = vmatpush1.bf16.msra.mxu0 %v1219
        %1243 = vmatprep.subr.bf16.mxu0 0
        %1244 = vmatpush2.bf16.msra.mxu0 0
        %1245 = vmatprep.subr.bf16.mxu0 0
        %1246 = vmatpush2.bf16.msra.mxu0 0
        %1247 = vmatprep.subr.bf16.mxu0 0
        %1248 = vmatpush2.bf16.msra.mxu0 0
        %1249 = vmatprep.subr.bf16.mxu0 0
        %1250 = vmatpush2.bf16.msra.mxu0 0
        %1251 = vmatprep.subr.bf16.mxu0 0
        %1252 = vmatpush2.bf16.msra.mxu0 0
        %1253 = vmatprep.subr.bf16.mxu0 0
        %1254 = vmatpush2.bf16.msra.mxu0 0
        %1255 = vmatprep.subr.bf16.mxu0 0
        %1256 = vmatpush2.bf16.msra.mxu0 0
        %1257 = vmatprep.subr.bf16.mxu0 0
        %1258 = vmatpush2.bf16.msra.mxu0 0
        %1259 = vmatprep.mubr.bf16.mxu0 0
        %1260 = vmatmul.mubr.bf16.gmra.mxu0 %v1216
        %v1261 = vpop.f32.mrf.mxu0
        %v1262 = vadd.f32 0.0, %v1261
        %v1263 = vpop.f32.mrf.mxu0
        %v1264 = vadd.f32 0.0, %v1263
        %v1265 = vpop.f32.mrf.mxu0
        %v1266 = vpop.f32.mrf.mxu0
        %1267 = vdwg.mxu0
        %1268 = vmatprep.subr.bf16.mxu0 0
        %1269 = vmatpush1.bf16.msra.mxu0 0
        %1270 = vmatprep.subr.bf16.mxu0 0
        %1271 = vmatpush1.bf16.msra.mxu0 0
        %1272 = vmatprep.subr.bf16.mxu0 0
        %1273 = vmatpush1.bf16.msra.mxu0 0
        %1274 = vmatprep.subr.bf16.mxu0 0
        %1275 = vmatpush1.bf16.msra.mxu0 0
        %1276 = vmatprep.subr.bf16.mxu0 0
        %1277 = vmatpush1.bf16.msra.mxu0 0
        %1278 = vmatprep.subr.bf16.mxu0 0
        %1279 = vmatpush1.bf16.msra.mxu0 0
        %1280 = vmatprep.subr.bf16.mxu0 0
        %1281 = vmatpush1.bf16.msra.mxu0 0
        %1282 = vmatprep.subr.bf16.mxu0 0
        %1283 = vmatpush1.bf16.msra.mxu0 %v1225
        %1284 = vmatprep.subr.bf16.mxu0 0
        %1285 = vmatpush2.bf16.msra.mxu0 0
        %1286 = vmatprep.subr.bf16.mxu0 0
        %1287 = vmatpush2.bf16.msra.mxu0 0
        %1288 = vmatprep.subr.bf16.mxu0 0
        %1289 = vmatpush2.bf16.msra.mxu0 0
        %1290 = vmatprep.subr.bf16.mxu0 0
        %1291 = vmatpush2.bf16.msra.mxu0 0
        %1292 = vmatprep.subr.bf16.mxu0 0
        %1293 = vmatpush2.bf16.msra.mxu0 0
        %1294 = vmatprep.subr.bf16.mxu0 0
        %1295 = vmatpush2.bf16.msra.mxu0 0
        %1296 = vmatprep.subr.bf16.mxu0 0
        %1297 = vmatpush2.bf16.msra.mxu0 0
        %1298 = vmatprep.subr.bf16.mxu0 0
        %1299 = vmatpush2.bf16.msra.mxu0 0
        %1300 = vmatprep.mubr.bf16.mxu0 0
        %1301 = vmatmul.mubr.bf16.gmra.mxu0 %v1216
        %v1302 = vpop.f32.mrf.mxu0
        %v1303 = vadd.f32 0.0, %v1302
        %v1304 = vpop.f32.mrf.mxu0
        %v1305 = vpop.f32.mrf.mxu0
        %v1306 = vpop.f32.mrf.mxu0
        %1307 = vdwg.mxu0
        %v1308 = vadd.f32 %v1183, %v1262
        %v1309 = vadd.f32 %v1184, %v1264
        %v1310 = vadd.f32 %v1185, %v1303
        %v1311 = vld [vmem:[%s216] sm:$0xff]
        %1313 = vset.pattern.permute.xlu0 0
        %1314 = vperm.xlu0 %1313, %v1311
        %v1315 = vpop.permute.xlu0 %1314
        %v1317 = vadd.f32 %v1308, %v1315
        %v1318 = vadd.f32 %v1309, %v1315
        %v1319 = vadd.f32 %v1310, %v1315
        %1320 = vst [vmem:[%s203] sm:$0xff] %v1317
        %1321 = vst [vmem:[%s203 + $0x8] sm:$0xff] %v1318
        %vm1322 = vcmask 261120
        %1323 = vst.msk [vmem:[%s203 + $0x10] sm:$0xff] %vm1322, %v1319
        %s1324 = sand.u32 %s117, 1
        %s1325 = scalar_lea.sflag [#allocation3], %s1324
        %s1326 = sand.u32 %s117, 1
        %s1327 = smul.addr %s1326, 24
        %s1328 = scalar_lea.vmem [#allocation2], %s1327
        // Predicated region
        $region33: #{tpu_custom_call.1} parent=31 // pred_check
          %p1329 = pneg %p127
        $region34: #{tpu_custom_call.1} parent=31 // pred_check_branch
          %1331 = sbr.rel (%p1329) target = $region36
        $region35: #{tpu_custom_call.1} parent=31 // pred_region
          %s1333 = ssub.s32 384, 384
          %1334 = vsyncadd %s1325, %s1333
          %s1335 = smul.addr %s22, 3
          %s1336 = smul.addr %s21, 3
          %s1337 = sadd.s32 %s1335, %s1336
          %s1338 = smul.addr %s1337, 128
          %s1339 = scalar_lea.hbm %s3, %s1338
          %s1341 = sshll.u32 %s1328, 4
          %s1342 = int_to_ptr.vmem [resolvable:$true] %s1341
          %1344 = dma.vmem_to_hbm [thread:$0]  %s1342, 384, %s1339, %s1325
        $region36: #{tpu_custom_call.1} parent=31 // pred_fallthru
          _
      $region32: #{tpu_custom_call.1} parent=5 // pred_fallthru
        _
      %p1345 = scmp.le.s32.totalorder 2, %s12
      // Predicated region
      $region37: #{tpu_custom_call.1} parent=5 // pred_check
        %p1346 = pneg %p1345
      $region38: #{tpu_custom_call.1} parent=5 // pred_check_branch
        %1348 = sbr.rel (%p1346) target = $region40
      $region39: #{tpu_custom_call.1} parent=5 // pred_region
        %s1349 = ssub.s32 %s12, 2
        // Predicated region
        $region41: #{tpu_custom_call.1} parent=39 // pred_check
          %p1350 = pneg %p133
        $region42: #{tpu_custom_call.1} parent=39 // pred_check_branch
          %1352 = sbr.rel (%p1350) target = $region44
        $region43: #{tpu_custom_call.1} parent=39 // pred_region
          %s1353 = sand.u32 %s118, 1
          %s1354 = scalar_lea.sflag [#allocation3], %s1353
          %s1355 = sand.u32 %s118, 1
          %s1356 = smul.addr %s1355, 24
          %s1357 = scalar_lea.vmem [#allocation2], %s1356
          %1358 = dma.done %s1354, 384
        $region44: #{tpu_custom_call.1} parent=39 // pred_fallthru
          _
      $region40: #{tpu_custom_call.1} parent=5 // pred_fallthru
        _
    $region6: #{tpu_custom_call.1} parent=1 // loop_footer
      %s16 = sadd.s32 1, %s12
    $region7: #{tpu_custom_call.1} parent=1 // loop_footer_branch
      %11 = sbr.rel target = $region3
    $region8: #{tpu_custom_call.1} parent=1 // loop_exit
      _
    %1359 = vsyncpa [#allocation3], 1
    %s1360 = scalar_lea.sflag [#allocation3], 1
    %1361 = vsyncpa %s1360, 1

</llo_original>
